<compile_context>
chip_gen: v7x
topology: tpu7x:2x2x1
jax: 0.10.0
libtpu: 0.0.40
codegen_flags: <defaults>
</compile_context>

<pallas_src>
from functools import partial

import jax
import jax.numpy as jnp
from jax import lax
from jax.experimental import pallas as pl
from jax.experimental.pallas import tpu as pltpu

LN_EPS = 1e-5  # torch.nn.LayerNorm default
MIB = 1024 * 1024


def _round_up(x, m):
    return ((x + m - 1) // m) * m


def _bias_layernorm_store(x, consts, embed_dim, n_pad, o_ref):
    """x: (tm, N_pad) f32 matmul result.  consts rows: 0=bias, 1=gamma, 2=beta."""
    bias = consts[0:1, :]
    gamma = consts[1:2, :]
    beta = consts[2:3, :]
    x = x + bias
    inv_e = 1.0 / float(embed_dim)
    # Padded lanes (>= embed_dim) of x are exactly zero (zero-padded weight and
    # bias columns), so the unmasked sum equals the sum over the true embed_dim.
    mean = jnp.sum(x, axis=-1, keepdims=True) * inv_e
    centered = x - mean
    # The unmasked sum of centered^2 over-counts (n_pad - embed_dim) lanes, each
    # contributing (0 - mean)^2; subtract that exactly (zero when n_pad == E).
    var = (jnp.sum(centered * centered, axis=-1, keepdims=True)
           - float(n_pad - embed_dim) * (mean * mean)) * inv_e
    o_ref[...] = (centered * lax.rsqrt(var + LN_EPS) * gamma + beta).astype(o_ref.dtype)


def _patch_embed_kernel(embed_dim, n_pad, patches_ref, w_ref, consts_ref, o_ref):
    # Single K block: one MXU matmul, fused bias + LayerNorm, one lane-dense store.
    x = jnp.dot(patches_ref[...], w_ref[...], preferred_element_type=jnp.float32)
    _bias_layernorm_store(x, consts_ref[...], embed_dim, n_pad, o_ref)


def _patch_embed_kernel_ktiled(embed_dim, n_pad,
                               patches_ref, w_ref, consts_ref, o_ref, acc_ref):
    # K-tiled: accumulate partial matmuls in f32 scratch, LayerNorm on last K step.
    k = pl.program_id(1)
    part = jnp.dot(patches_ref[...], w_ref[...], preferred_element_type=jnp.float32)

    @pl.when(k == 0)
    def _():
        acc_ref[...] = part

    @pl.when(k > 0)
    def _():
        acc_ref[...] += part

    @pl.when(k == pl.num_programs(1) - 1)
    def _():
        _bias_layernorm_store(acc_ref[...], consts_ref[...], embed_dim, n_pad, o_ref)


def patch_embed(x, conv_w, conv_b, ln_gamma, ln_beta, patch_size, *,
                matmul_dtype=jnp.bfloat16, tile_m=512, tile_k=None, out_dtype=None):
    """x: (B, C, H, W) NCHW, conv_w: (E, C, pH, pW), conv_b/ln_*: (E,)."""
    B, C, H, W = x.shape
    pH, pW = patch_size
    E = conv_w.shape[0]
    Hp, Wp = H // pH, W // pW
    num_patches = Hp * Wp
    out_dtype = x.dtype if out_dtype is None else jnp.dtype(out_dtype)

    # --- patch extraction (XLA-side; allow_input_fusion lets XLA fuse it into the
    # pallas operand instead of materializing the patch matrix separately) ---
    patches = x.reshape(B, C, Hp, pH, Wp, pW)
    patches = patches.transpose(0, 2, 4, 1, 3, 5)
    patches = patches.reshape(B * num_patches, C * pH * pW).astype(matmul_dtype)
    # Conv weight (E, C, pH, pW) -> (K, E) so that patches @ w == conv output.
    w_mat = conv_w.reshape(E, C * pH * pW).T

    M, K = patches.shape
    N_pad = _round_up(E, 128)  # lane-dense output / last dim

    in_itemsize = jnp.dtype(matmul_dtype).itemsize
    out_itemsize = jnp.dtype(out_dtype).itemsize

    def vmem_estimate(tm_, tk_):
        return (2 * tm_ * tk_ * in_itemsize       # patches tile (double-buffered)
                + 2 * tk_ * N_pad * in_itemsize   # weight tile (double-buffered)
                + 2 * tm_ * N_pad * out_itemsize  # output tile (double-buffered)
                + 2 * 8 * N_pad * 4               # packed bias/gamma/beta block
                + tm_ * N_pad * 4                 # f32 accumulator (K-tiled path)
                + 2 * tm_ * N_pad * 4)            # f32 intermediates headroom

    # --- generation-aware VMEM budget (v7x: 64 MiB/TC, v5e/v6e: 128 MiB) ---
    try:
        vmem_cap = int(pltpu.get_tpu_info().vmem_capacity_bytes)
    except Exception:          # conservative fallback if the query is unavailable
        vmem_cap = 64 * MIB
    if vmem_cap >= 96 * MIB:   # v5e / v6e class (128 MiB physical VMEM)
        budget, limit_cap = 96 * MIB, 100 * MIB
    else:                      # v7x class (64 MiB per TensorCore) - leave headroom
        budget, limit_cap = 40 * MIB, 48 * MIB

    # --- tile sizing ---
    MIN_TM = 256   # never shrink the MXU M tile below this; tile K instead
    SUB = 16       # sublane multiple safe for both f32 and bf16 blocks
    tm = M if M <= tile_m else max(SUB, (tile_m // SUB) * SUB)

    if tile_k is not None:
        tk = int(tile_k)
        assert K % tk == 0 and tk % 128 == 0, \
            "tile_k must divide K and be a multiple of 128"
    else:
        tk = K
        if vmem_estimate(tm, tk) > budget:
            # Prefer K-tiling (keeps MXU-efficient M tiles and bounds the resident
            # weight footprint) over shrinking tm.
            nb = 2
            while 128 * nb <= K:
                cand = K // nb
                if K % nb == 0 and cand % 128 == 0 and vmem_estimate(tm, cand) <= budget:
                    tk = cand
                    break
                nb += 1
        # Last resort: shrink the M tile, but never below MIN_TM.
        while vmem_estimate(tm, tk) > budget and tm > MIN_TM:
            tm = max(MIN_TM, _round_up(tm // 2, SUB))

    k_blocks = K // tk
    multi_k = k_blocks > 1
    grid = (pl.cdiv(M, tm), k_blocks)   # no jnp.pad of the patch matrix needed

    # --- pad / cast the small operands (weight + packed LN constants) ---
    if N_pad != E:
        w_mat = jnp.pad(w_mat, ((0, 0), (0, N_pad - E)))
    w_mat = w_mat.astype(matmul_dtype)

    consts = jnp.stack([conv_b, ln_gamma, ln_beta]).astype(jnp.float32)   # (3, E)
    consts = jnp.pad(consts, ((0, 8 - 3), (0, N_pad - E)))                # (8, N_pad)

    bytes_accessed = (M * K * in_itemsize + K * N_pad * in_itemsize
                      + 8 * N_pad * 4 + M * N_pad * out_itemsize)
    cost = pl.CostEstimate(flops=2 * M * K * N_pad, transcendentals=M,
                           bytes_accessed=bytes_accessed)

    vmem_limit = int(min(max(2 * vmem_estimate(tm, tk), 32 * MIB), limit_cap))

    if multi_k:
        kernel = partial(_patch_embed_kernel_ktiled, E, N_pad)
        scratch_shapes = [pltpu.VMEM((tm, N_pad), jnp.float32)]
    else:
        kernel = partial(_patch_embed_kernel, E, N_pad)
        scratch_shapes = []

    out = pl.pallas_call(
        kernel,
        out_shape=jax.ShapeDtypeStruct((M, N_pad), out_dtype),
        grid=grid,
        in_specs=[
            pl.BlockSpec((tm, tk), lambda i, k: (i, k)),       # patches: M/K tiled
            pl.BlockSpec((tk, N_pad), lambda i, k: (k, 0)),    # weight: resident / K tiled
            pl.BlockSpec((8, N_pad), lambda i, k: (0, 0)),     # packed bias/gamma/beta
        ],
        out_specs=pl.BlockSpec((tm, N_pad), lambda i, k: (i, 0)),
        scratch_shapes=scratch_shapes,
        compiler_params=pltpu.CompilerParams(
            dimension_semantics=("parallel", "arbitrary"),
            vmem_limit_bytes=vmem_limit,
            allow_input_fusion=[True, False, False],
        ),
        cost_estimate=cost,
    )(patches, w_mat, consts)

    out = out[:, :E].reshape(B, num_patches, E)
    return out, (Hp, Wp)


def _reference(x, conv_w, conv_b, ln_gamma, ln_beta, patch_size):
    """Plain-JAX reference matching the PyTorch forward (for sanity check)."""
    pH, pW = patch_size
    y = lax.conv_general_dilated(
        x, conv_w, window_strides=(pH, pW), padding="VALID",
        dimension_numbers=("NCHW", "OIHW", "NCHW"),
    ) + conv_b.reshape(1, -1, 1, 1)
    B, E, Hp, Wp = y.shape
    y = y.reshape(B, E, Hp * Wp).transpose(0, 2, 1)  # flatten(2).transpose(1,2)
    mean = jnp.mean(y, axis=-1, keepdims=True)
    var = jnp.mean((y - mean) ** 2, axis=-1, keepdims=True)
    yn = (y - mean) * lax.rsqrt(var + LN_EPS)
    return yn * ln_gamma + ln_beta, (Hp, Wp)


if __name__ == "__main__":
    key = jax.random.PRNGKey(0)

    # --- test 1: module-consistent small shapes ---
    B, C, H, W = 2, 4, 16, 16
    patch_size = (4, 4)
    embed_dim = 32

    kx, kw, kb, kg, kbeta = jax.random.split(key, 5)
    x = jax.random.normal(kx, (B, C, H, W), dtype=jnp.float32)
    conv_w = jax.random.normal(kw, (embed_dim, C, patch_size[0], patch_size[1]),
                               dtype=jnp.float32) * 0.05
    conv_b = jax.random.normal(kb, (embed_dim,), dtype=jnp.float32) * 0.05
    ln_gamma = 1.0 + 0.1 * jax.random.normal(kg, (embed_dim,), dtype=jnp.float32)
    ln_beta = 0.1 * jax.random.normal(kbeta, (embed_dim,), dtype=jnp.float32)

    ref, (Hr, Wr) = _reference(x, conv_w, conv_b, ln_gamma, ln_beta, patch_size)

    # f32 matmul path (tight tolerance)
    out32, (Hp, Wp) = patch_embed(x, conv_w, conv_b, ln_gamma, ln_beta, patch_size,
                                  matmul_dtype=jnp.float32)
    out32 = jax.block_until_ready(out32)
    assert out32.shape == (B, (H // patch_size[0]) * (W // patch_size[1]), embed_dim)
    assert (Hp, Wp) == (Hr, Wr)
    assert jnp.allclose(out32, ref, atol=1e-4, rtol=1e-4)

    # bf16 matmul path (production default; accumulation stays f32)
    out16, _ = patch_embed(x, conv_w, conv_b, ln_gamma, ln_beta, patch_size,
                           matmul_dtype=jnp.bfloat16)
    out16 = jax.block_until_ready(out16)
    assert jnp.allclose(out16, ref, atol=5e-2, rtol=5e-2)

    # bf16 output path (halves the HBM write on mem-bound parts)
    outb, _ = patch_embed(x, conv_w, conv_b, ln_gamma, ln_beta, patch_size,
                          matmul_dtype=jnp.float32, out_dtype=jnp.bfloat16)
    outb = jax.block_until_ready(outb)
    assert outb.dtype == jnp.bfloat16
    assert jnp.allclose(outb.astype(jnp.float32), ref, atol=5e-2, rtol=5e-2)

    # --- test 2: multi-tile M grid (M=128, tile_m=32) + lane padding (E=48) ---
    B2, C2, H2, W2, E2 = 2, 3, 32, 32, 48
    k2 = jax.random.split(key, 10)
    x2 = jax.random.normal(k2[5], (B2, C2, H2, W2), dtype=jnp.float32)
    w2 = jax.random.normal(k2[6], (E2, C2, 4, 4), dtype=jnp.float32) * 0.05
    b2 = jax.random.normal(k2[7], (E2,), dtype=jnp.float32) * 0.05
    g2 = 1.0 + 0.1 * jax.random.normal(k2[8], (E2,), dtype=jnp.float32)
    be2 = 0.1 * jax.random.normal(k2[9], (E2,), dtype=jnp.float32)

    out2, (Hp2, Wp2) = patch_embed(x2, w2, b2, g2, be2, (4, 4),
                                   matmul_dtype=jnp.float32, tile_m=32)
    out2 = jax.block_until_ready(out2)
    ref2, (Hr2, Wr2) = _reference(x2, w2, b2, g2, be2, (4, 4))
    assert (Hp2, Wp2) == (Hr2, Wr2)
    assert jnp.allclose(out2, ref2, atol=1e-4, rtol=1e-4)

    # --- test 3: K-tiled accumulator path (K=256, tile_k=128, 2 K blocks) ---
    B3, C3, H3, W3, E3 = 1, 16, 16, 16, 64
    k3 = jax.random.split(key, 15)
    x3 = jax.random.normal(k3[10], (B3, C3, H3, W3), dtype=jnp.float32)
    w3 = jax.random.normal(k3[11], (E3, C3, 4, 4), dtype=jnp.float32) * 0.05
    b3 = jax.random.normal(k3[12], (E3,), dtype=jnp.float32) * 0.05
    g3 = 1.0 + 0.1 * jax.random.normal(k3[13], (E3,), dtype=jnp.float32)
    be3 = 0.1 * jax.random.normal(k3[14], (E3,), dtype=jnp.float32)

    out3, (Hp3, Wp3) = patch_embed(x3, w3, b3, g3, be3, (4, 4),
                                   matmul_dtype=jnp.float32, tile_k=128)
    out3 = jax.block_until_ready(out3)
    ref3, (Hr3, Wr3) = _reference(x3, w3, b3, g3, be3, (4, 4))
    assert (Hp3, Wp3) == (Hr3, Wr3)
    assert jnp.allclose(out3, ref3, atol=1e-4, rtol=1e-4)

    print("KERNEL_OK")
</pallas_src>

<mosaic_0001>
module attributes {stable_mosaic.version = 11 : i64} {
  func.func @_patch_embed_kernel(%arg0: i32, %arg1: i32, %arg2: memref<32x64xf32, #tpu.memory_space<vmem>>, %arg3: memref<64x128xf32, #tpu.memory_space<vmem>>, %arg4: memref<8x128xf32, #tpu.memory_space<vmem>>, %arg5: memref<32x128xf32, #tpu.memory_space<vmem>>) attributes {dimension_semantics = [#tpu.dimension_semantics<parallel>, #tpu.dimension_semantics<arbitrary>], iteration_bounds = array<i64: 1, 1>, scalar_prefetch = 0 : i64, scratch_operands = 0 : i64, tpu.core_type = #tpu.core_type<tc>, window_params = [{transform_indices = @transform_0, window_bounds = array<i64: 32, 64>}, {transform_indices = @transform_1, window_bounds = array<i64: 64, 128>}, {pipeline_mode = #tpu.pipeline_mode<synchronous>, transform_indices = @transform_2, window_bounds = array<i64: 8, 128>}, {transform_indices = @transform_3, window_bounds = array<i64: 32, 128>}]} {
    %c0 = arith.constant 0 : index
    %c0_0 = arith.constant 0 : index
    %0 = vector.load %arg2[%c0, %c0_0] : memref<32x64xf32, #tpu.memory_space<vmem>>, vector<32x64xf32>
    %c0_1 = arith.constant 0 : index
    %c0_2 = arith.constant 0 : index
    %1 = vector.load %arg3[%c0_1, %c0_2] : memref<64x128xf32, #tpu.memory_space<vmem>>, vector<64x128xf32>
    %cst = arith.constant dense<0.000000e+00> : vector<32x128xf32>
    %2 = tpu.matmul %0, %1, %cst {dimension_numbers = #tpu.dot_dimension_numbers<[1], [0], [0], [1], [0, 0, 1, 1], [], []>} : vector<32x64xf32>, vector<64x128xf32>, vector<32x128xf32> -> vector<32x128xf32>
    %c0_3 = arith.constant 0 : index
    %c0_4 = arith.constant 0 : index
    %3 = vector.load %arg4[%c0_3, %c0_4] : memref<8x128xf32, #tpu.memory_space<vmem>>, vector<8x128xf32>
    %4 = vector.extract_strided_slice %3 {offsets = [0, 0], sizes = [1, 128], strides = [1, 1]} : vector<8x128xf32> to vector<1x128xf32>
    %5 = vector.extract_strided_slice %3 {offsets = [1, 0], sizes = [1, 128], strides = [1, 1]} : vector<8x128xf32> to vector<1x128xf32>
    %6 = vector.extract_strided_slice %3 {offsets = [2, 0], sizes = [1, 128], strides = [1, 1]} : vector<8x128xf32> to vector<1x128xf32>
    %7 = vector.broadcast %4 : vector<1x128xf32> to vector<32x128xf32>
    %8 = arith.addf %2, %7 : vector<32x128xf32>
    %cst_5 = arith.constant dense<0.000000e+00> : vector<32xf32>
    %9 = vector.multi_reduction <add>, %8, %cst_5 [1] : vector<32x128xf32> to vector<32xf32>
    %10 = vector.shape_cast %9 : vector<32xf32> to vector<32x1xf32>
    %cst_6 = arith.constant 3.125000e-02 : f32
    %11 = vector.broadcast %cst_6 : f32 to vector<32x1xf32>
    %12 = arith.mulf %10, %11 : vector<32x1xf32>
    %13 = vector.broadcast %12 : vector<32x1xf32> to vector<32x128xf32>
    %14 = arith.subf %8, %13 : vector<32x128xf32>
    %15 = arith.mulf %14, %14 : vector<32x128xf32>
    %cst_7 = arith.constant dense<0.000000e+00> : vector<32xf32>
    %16 = vector.multi_reduction <add>, %15, %cst_7 [1] : vector<32x128xf32> to vector<32xf32>
    %17 = vector.shape_cast %16 : vector<32xf32> to vector<32x1xf32>
    %18 = arith.mulf %12, %12 : vector<32x1xf32>
    %cst_8 = arith.constant 9.600000e+01 : f32
    %19 = vector.broadcast %cst_8 : f32 to vector<32x1xf32>
    %20 = arith.mulf %19, %18 : vector<32x1xf32>
    %21 = arith.subf %17, %20 : vector<32x1xf32>
    %cst_9 = arith.constant 3.125000e-02 : f32
    %22 = vector.broadcast %cst_9 : f32 to vector<32x1xf32>
    %23 = arith.mulf %21, %22 : vector<32x1xf32>
    %cst_10 = arith.constant 9.99999974E-6 : f32
    %24 = vector.broadcast %cst_10 : f32 to vector<32x1xf32>
    %25 = arith.addf %23, %24 : vector<32x1xf32>
    %26 = math.rsqrt %25 : vector<32x1xf32>
    %27 = vector.broadcast %26 : vector<32x1xf32> to vector<32x128xf32>
    %28 = arith.mulf %14, %27 : vector<32x128xf32>
    %29 = vector.broadcast %5 : vector<1x128xf32> to vector<32x128xf32>
    %30 = arith.mulf %28, %29 : vector<32x128xf32>
    %31 = vector.broadcast %6 : vector<1x128xf32> to vector<32x128xf32>
    %32 = arith.addf %30, %31 : vector<32x128xf32>
    %c0_11 = arith.constant 0 : index
    %c0_12 = arith.constant 0 : index
    %33 = vector.load %arg5[%c0_11, %c0_12] : memref<32x128xf32, #tpu.memory_space<vmem>>, vector<32x128xf32>
    tpu.vector_store %arg5[%c0_11, %c0_12], %32 {strides = array<i32>} : memref<32x128xf32, #tpu.memory_space<vmem>>, vector<32x128xf32>,
    return
  }
  func.func @transform_0(%arg0: i32, %arg1: i32) -> (i32, i32) {
    %c0_i32 = arith.constant 0 : i32
    return %arg0, %arg1 : i32, i32
  }
  func.func @transform_1(%arg0: i32, %arg1: i32) -> (i32, i32) {
    %c0_i32 = arith.constant 0 : i32
    %c0_i32_0 = arith.constant 0 : i32
    return %arg1, %c0_i32 : i32, i32
  }
  func.func @transform_2(%arg0: i32, %arg1: i32) -> (i32, i32) {
    %c0_i32 = arith.constant 0 : i32
    %c0_i32_0 = arith.constant 0 : i32
    %c0_i32_1 = arith.constant 0 : i32
    return %c0_i32, %c0_i32_0 : i32, i32
  }
  func.func @transform_3(%arg0: i32, %arg1: i32) -> (i32, i32) {
    %c0_i32 = arith.constant 0 : i32
    %c0_i32_0 = arith.constant 0 : i32
    return %arg0, %c0_i32 : i32, i32
  }
}

</mosaic_0001>

<llo_original>
// kernel: tpu_custom_call.1
$region0: #{tpu_custom_call.1}
  #allocation0 [shape = 'u32[]', space=smem, size = 0x4, offset = 0x4, fixed_abs, tag = 'smem constant byte address 0x4 - core index']
  #allocation1 [shape = 'u32[144,128]{1,0:T(1,128)}', space=vmem, size = 0x12000, scoped, tag = 'internal scratch']
  %s0 = inlined_call_operand.hbm [shape: f32[32,64], index: 0, kind: input, shape index: {}]
  %s1 = inlined_call_operand.hbm [shape: f32[64,128], index: 1, kind: input, shape index: {}]
  %s2 = inlined_call_operand.hbm [shape: f32[8,128], index: 2, kind: input, shape index: {}]
  %s3 = inlined_call_operand.hbm [shape: f32[32,128], index: 3, kind: output, shape index: {}]
  %s4 = sld [smem:[#allocation0]]
  $region34: #{tpu_custom_call.1} parent=0
    _
  %s6 = ssub.s32 1, %s4
  %s7 = scalar_select 0, %s6, %s4
  $region1: #{tpu_custom_call.1} parent=0
    #allocation2 [shape = 'u8[16384]{0}', space=vmem, size = 0x4000, scoped, tag = 'input window, operand 0, single buffered']
    #allocation3 [shape = 's32[1]{0}', space=sflag, size = 0x4, scoped, tag = 'scoped memory for tpu_custom_call.1']
    #allocation4 [shape = 's32[1]{0}', space=sflag, size = 0x4, scoped, tag = 'scoped memory for tpu_custom_call.1']
    #allocation5 [shape = 'u8[32768]{0}', space=vmem, size = 0x8000, scoped, tag = 'input window, operand 1, single buffered']
    #allocation6 [shape = 's32[1]{0}', space=sflag, size = 0x4, scoped, tag = 'scoped memory for tpu_custom_call.1']
    #allocation7 [shape = 'u8[4096]{0}', space=vmem, size = 0x1000, scoped, tag = 'input window, operand 2, single buffered']
    #allocation8 [shape = 'u8[16384]{0}', space=vmem, size = 0x4000, scoped, tag = 'output window, operand 0, single buffered']
    %8 = vsyncpa [#allocation3], 0
    %9 = vsyncpa [#allocation6], 0
    %10 = vsyncpa [#allocation4], 0
    // Predicated region
    $region2: #{tpu_custom_call.1} parent=1 // pred_check
      _
    $region3: #{tpu_custom_call.1} parent=1 // pred_check_branch
      %12 = sbr.rel (0) target = $region5
    $region4: #{tpu_custom_call.1} parent=1 // pred_region
      %s14 = ssub.s32 512, 512
      %15 = vsyncadd [#allocation3], %s14
      %s16 = sshll.u32 [#allocation2], 4
      %s17 = int_to_ptr.vmem [resolvable:$true] %s16
      %22 = dma.hbm_to_vmem [thread:$0]  %s0, 512, %s17, [#allocation3], 128, 128, 8
    $region5: #{tpu_custom_call.1} parent=1 // pred_fallthru
      _
    // Predicated region
    $region6: #{tpu_custom_call.1} parent=1 // pred_check
      _
    $region7: #{tpu_custom_call.1} parent=1 // pred_check_branch
      %24 = sbr.rel (0) target = $region9
    $region8: #{tpu_custom_call.1} parent=1 // pred_region
      %s26 = ssub.s32 1024, 1024
      %27 = vsyncadd [#allocation6], %s26
      %s28 = sshll.u32 [#allocation5], 4
      %s29 = int_to_ptr.vmem [resolvable:$true] %s28
      %34 = dma.hbm_to_vmem [thread:$0]  %s1, 1024, %s29, [#allocation6], 128, 128, 8
    $region9: #{tpu_custom_call.1} parent=1 // pred_fallthru
      _
    // Predicated region
    $region10: #{tpu_custom_call.1} parent=1 // pred_check
      _
    $region11: #{tpu_custom_call.1} parent=1 // pred_check_branch
      %36 = sbr.rel (0) target = $region13
    $region12: #{tpu_custom_call.1} parent=1 // pred_region
      %s38 = ssub.s32 128, 128
      %39 = vsyncadd [#allocation6], %s38
      %s41 = sshll.u32 [#allocation7], 4
      %s42 = int_to_ptr.vmem [resolvable:$true] %s41
      %44 = dma.hbm_to_vmem [thread:$0]  %s2, 128, %s42, [#allocation6]
    $region13: #{tpu_custom_call.1} parent=1 // pred_fallthru
      _
    // Predicated region
    $region14: #{tpu_custom_call.1} parent=1 // pred_check
      _
    $region15: #{tpu_custom_call.1} parent=1 // pred_check_branch
      %46 = sbr.rel (0) target = $region17
    $region16: #{tpu_custom_call.1} parent=1 // pred_region
      %47 = dma.done [#allocation3], 512
    $region17: #{tpu_custom_call.1} parent=1 // pred_fallthru
      _
    // Predicated region
    $region18: #{tpu_custom_call.1} parent=1 // pred_check
      _
    $region19: #{tpu_custom_call.1} parent=1 // pred_check_branch
      %49 = sbr.rel (0) target = $region21
    $region20: #{tpu_custom_call.1} parent=1 // pred_region
      %50 = dma.done [#allocation6], 1024
    $region21: #{tpu_custom_call.1} parent=1 // pred_fallthru
      _
    // Predicated region
    $region22: #{tpu_custom_call.1} parent=1 // pred_check
      _
    $region23: #{tpu_custom_call.1} parent=1 // pred_check_branch
      %52 = sbr.rel (0) target = $region25
    $region24: #{tpu_custom_call.1} parent=1 // pred_region
      %53 = dma.done [#allocation6], 128
    $region25: #{tpu_custom_call.1} parent=1 // pred_fallthru
      _
    %v54 = vld [vmem:[#allocation2] sm:$0xff]
    %v55 = vld [vmem:[#allocation2 + $0x8] sm:$0xff]
    %v56 = vld [vmem:[#allocation2 + $0x10] sm:$0xff]
    %v57 = vld [vmem:[#allocation2 + $0x18] sm:$0xff]
    %v58 = vld [vmem:[#allocation5] sm:$0xff]
    %v59 = vld [vmem:[#allocation5 + $0x8] sm:$0xff]
    %v60 = vld [vmem:[#allocation5 + $0x10] sm:$0xff]
    %v61 = vld [vmem:[#allocation5 + $0x18] sm:$0xff]
    %v62 = vld [vmem:[#allocation5 + $0x20] sm:$0xff]
    %v63 = vld [vmem:[#allocation5 + $0x28] sm:$0xff]
    %v64 = vld [vmem:[#allocation5 + $0x30] sm:$0xff]
    %v65 = vld [vmem:[#allocation5 + $0x38] sm:$0xff]
    %v66 = vld [vmem:[#allocation7] sm:$0xff]
    %v67 = vlaneseq
    %v68 = vshrl.u32 %v67, 7
    %v69 = vsub.s32 0, %v68
    %v70 = vrot.slane %v66, %v69
    %vm71 = vcmask 523264
    %v73 = vsel %vm71, %v54, 0
    %v76 = vsel %vm71, %v55, 0
    %v79 = vsel %vm71, %v56, 0
    %v82 = vsel %vm71, %v57, 0
    %84 = vmatprep.subr.mxu0 0.0
    %85 = vmatpush1.msra.mxu0 %v58
    %86 = vmatprep.subr.mxu0 0.0
    %87 = vmatpush1.msra.mxu0 %v59
    %88 = vmatprep.subr.mxu0 0.0
    %89 = vmatpush1.msra.mxu0 %v60
    %90 = vmatprep.subr.mxu0 0.0
    %91 = vmatpush1.msra.mxu0 %v61
    %92 = vmatprep.subr.mxu0 0.0
    %93 = vmatpush1.msra.mxu0 %v62
    %94 = vmatprep.subr.mxu0 0.0
    %95 = vmatpush1.msra.mxu0 %v63
    %96 = vmatprep.subr.mxu0 0.0
    %97 = vmatpush1.msra.mxu0 %v64
    %98 = vmatprep.subr.mxu0 0.0
    %99 = vmatpush1.msra.mxu0 %v65
    %100 = vmatprep.subr.mxu0 0.0
    %101 = vmatpush1.msra.mxu0 0.0
    %102 = vmatprep.subr.mxu0 0.0
    %103 = vmatpush1.msra.mxu0 0.0
    %104 = vmatprep.subr.mxu0 0.0
    %105 = vmatpush1.msra.mxu0 0.0
    %106 = vmatprep.subr.mxu0 0.0
    %107 = vmatpush1.msra.mxu0 0.0
    %108 = vmatprep.subr.mxu0 0.0
    %109 = vmatpush1.msra.mxu0 0.0
    %110 = vmatprep.subr.mxu0 0.0
    %111 = vmatpush1.msra.mxu0 0.0
    %112 = vmatprep.subr.mxu0 0.0
    %113 = vmatpush1.msra.mxu0 0.0
    %114 = vmatprep.subr.mxu0 0.0
    %115 = vmatpush1.msra.mxu0 0.0
    %116 = vmatprep.subr.mxu0 0.0
    %117 = vmatpush1.msra.mxu0 0.0
    %118 = vmatprep.subr.mxu0 0.0
    %119 = vmatpush1.msra.mxu0 0.0
    %120 = vmatprep.subr.mxu0 0.0
    %121 = vmatpush1.msra.mxu0 0.0
    %122 = vmatprep.subr.mxu0 0.0
    %123 = vmatpush1.msra.mxu0 0.0
    %124 = vmatprep.subr.mxu0 0.0
    %125 = vmatpush1.msra.mxu0 0.0
    %126 = vmatprep.subr.mxu0 0.0
    %127 = vmatpush1.msra.mxu0 0.0
    %128 = vmatprep.subr.mxu0 0.0
    %129 = vmatpush1.msra.mxu0 0.0
    %130 = vmatprep.subr.mxu0 0.0
    %131 = vmatpush1.msra.mxu0 0.0
    %132 = vmatprep.subr.mxu0 0.0
    %133 = vmatpush1.msra.mxu0 0.0
    %134 = vmatprep.subr.mxu0 0.0
    %135 = vmatpush1.msra.mxu0 0.0
    %136 = vmatprep.subr.mxu0 0.0
    %137 = vmatpush1.msra.mxu0 0.0
    %138 = vmatprep.subr.mxu0 0.0
    %139 = vmatpush1.msra.mxu0 0.0
    %140 = vmatprep.subr.mxu0 0.0
    %141 = vmatpush1.msra.mxu0 0.0
    %142 = vmatprep.subr.mxu0 0.0
    %143 = vmatpush1.msra.mxu0 0.0
    %144 = vmatprep.subr.mxu0 0.0
    %145 = vmatpush1.msra.mxu0 0.0
    %146 = vmatprep.subr.mxu0 0.0
    %147 = vmatpush1.msra.mxu0 0.0
    %148 = vmatprep.mubr.f32.mxu0 0.0
    %149 = vmatmul.mubr.f32.gmra.mrb[0].mxu0 %v73
    %v150 = vpop.f32.mrb[0].mxu0
    %v151 = vadd.f32 %v70, %v150
    %v152 = vpop.f32.mrb[0].mxu0
    %153 = vmatprep.mubr.f32.mxu0 0.0
    %154 = vmatmul.mubr.f32.gmra.mrb[0].mxu0 %v76
    %v155 = vpop.f32.mrb[0].mxu0
    %v156 = vadd.f32 %v70, %v155
    %v157 = vpop.f32.mrb[0].mxu0
    %158 = vmatprep.mubr.f32.mxu0 0.0
    %159 = vmatmul.mubr.f32.gmra.mrb[0].mxu0 %v79
    %v160 = vpop.f32.mrb[0].mxu0
    %v161 = vadd.f32 %v70, %v160
    %v162 = vpop.f32.mrb[0].mxu0
    %163 = vmatprep.mubr.f32.mxu0 0.0
    %164 = vmatmul.mubr.f32.gmra.mrb[0].mxu0 %v82
    %v165 = vpop.f32.mrb[0].mxu0
    %v166 = vadd.f32 %v70, %v165
    %v167 = vpop.f32.mrb[0].mxu0
    %168 = vdwg.mxu0
    %169 = vadd.xlane.f32.xlu0 %v151
    %v170 = vpop.xlane.xlu0 %169
    %171 = vadd.xlane.f32.xlu0 %v156
    %v172 = vpop.xlane.xlu0 %171
    %173 = vadd.xlane.f32.xlu0 %v161
    %v174 = vpop.xlane.xlu0 %173
    %175 = vadd.xlane.f32.xlu0 %v166
    %v176 = vpop.xlane.xlu0 %175
    %v177 = vmul.f32 %v170, 0.03125
    %v178 = vmul.f32 %v172, 0.03125
    %v179 = vmul.f32 %v174, 0.03125
    %v180 = vmul.f32 %v176, 0.03125
    %v181 = vsub.f32 %v151, %v177
    %v182 = vsub.f32 %v156, %v178
    %v183 = vsub.f32 %v161, %v179
    %v184 = vsub.f32 %v166, %v180
    %v185 = vmul.f32 %v181, %v181
    %v186 = vmul.f32 %v182, %v182
    %v187 = vmul.f32 %v183, %v183
    %v188 = vmul.f32 %v184, %v184
    %189 = vadd.xlane.f32.xlu0 %v185
    %v190 = vpop.xlane.xlu0 %189
    %191 = vadd.xlane.f32.xlu0 %v186
    %v192 = vpop.xlane.xlu0 %191
    %193 = vadd.xlane.f32.xlu0 %v187
    %v194 = vpop.xlane.xlu0 %193
    %195 = vadd.xlane.f32.xlu0 %v188
    %v196 = vpop.xlane.xlu0 %195
    %v197 = vmul.f32 %v177, %v177
    %v198 = vmul.f32 %v178, %v178
    %v199 = vmul.f32 %v179, %v179
    %v200 = vmul.f32 %v180, %v180
    %v201 = vmul.f32 %v197, 96.0
    %v202 = vmul.f32 %v198, 96.0
    %v203 = vmul.f32 %v199, 96.0
    %v204 = vmul.f32 %v200, 96.0
    %v205 = vsub.f32 %v190, %v201
    %v206 = vsub.f32 %v192, %v202
    %v207 = vsub.f32 %v194, %v203
    %v208 = vsub.f32 %v196, %v204
    %v209 = vmul.f32 %v205, 0.03125
    %v210 = vmul.f32 %v206, 0.03125
    %v211 = vmul.f32 %v207, 0.03125
    %v212 = vmul.f32 %v208, 0.03125
    %v213 = vadd.f32 %v209, 1e-05
    %v214 = vadd.f32 %v210, 1e-05
    %v215 = vadd.f32 %v211, 1e-05
    %v216 = vadd.f32 %v212, 1e-05
    %v217 = vrsqrt.pop %v213
    %v218 = vrsqrt.pop %v214
    %v219 = vrsqrt.pop %v215
    %v220 = vrsqrt.pop %v216
    %v221 = vmul.f32 %v181, %v217
    %v222 = vmul.f32 %v182, %v218
    %v223 = vmul.f32 %v183, %v219
    %v224 = vmul.f32 %v184, %v220
    %v225 = vlaneseq
    %v226 = vshrl.u32 %v225, 7
    %v227 = vsub.s32 1, %v226
    %v228 = vrot.slane %v66, %v227
    %v229 = vmul.f32 %v221, %v228
    %v230 = vmul.f32 %v222, %v228
    %v231 = vmul.f32 %v223, %v228
    %v232 = vmul.f32 %v224, %v228
    %v233 = vlaneseq
    %v234 = vshrl.u32 %v233, 7
    %v235 = vsub.s32 2, %v234
    %v236 = vrot.slane %v66, %v235
    %v237 = vadd.f32 %v229, %v236
    %v238 = vadd.f32 %v230, %v236
    %v239 = vadd.f32 %v231, %v236
    %v240 = vadd.f32 %v232, %v236
    %241 = vst [vmem:[#allocation8] sm:$0xff] %v237
    %242 = vst [vmem:[#allocation8 + $0x8] sm:$0xff] %v238
    %243 = vst [vmem:[#allocation8 + $0x10] sm:$0xff] %v239
    %244 = vst [vmem:[#allocation8 + $0x18] sm:$0xff] %v240
    // Predicated region
    $region26: #{tpu_custom_call.1} parent=1 // pred_check
      _
    $region27: #{tpu_custom_call.1} parent=1 // pred_check_branch
      %246 = sbr.rel (0) target = $region29
    $region28: #{tpu_custom_call.1} parent=1 // pred_region
      %s248 = ssub.s32 512, 512
      %249 = vsyncadd [#allocation4], %s248
      %s250 = sshll.u32 [#allocation8], 4
      %s251 = int_to_ptr.vmem [resolvable:$true] %s250
      %256 = dma.vmem_to_hbm [thread:$0]  %s251, 512, %s3, [#allocation4], 128, 128, 8
    $region29: #{tpu_custom_call.1} parent=1 // pred_fallthru
      _
    // Predicated region
    $region30: #{tpu_custom_call.1} parent=1 // pred_check
      _
    $region31: #{tpu_custom_call.1} parent=1 // pred_check_branch
      %258 = sbr.rel (0) target = $region33
    $region32: #{tpu_custom_call.1} parent=1 // pred_region
      %259 = dma.done [#allocation4], 512
    $region33: #{tpu_custom_call.1} parent=1 // pred_fallthru
      _
    %260 = vsyncpa [#allocation3], 1
    %261 = vsyncpa [#allocation6], 1
    %262 = vsyncpa [#allocation4], 1

</llo_original>
